<compile_context>
chip_gen: v7x
topology: tpu7x:2x2x1
jax: 0.10.0
libtpu: 0.0.40
codegen_flags: <defaults>
</compile_context>

<pallas_src>
import functools

import jax
import jax.numpy as jnp
from jax.experimental import pallas as pl
from jax.experimental.pallas import tpu as pltpu


def _ceil_to(x: int, m: int) -> int:
    return ((x + m - 1) // m) * m


def _wrap_model_kernel(x_ref, w_ref, b_ref, y_ref, preds_ref, nll_ref, *, batch, tile_b):
    # --- inner model: linear layer (MXU matmul, f32 accumulation) ---
    x = x_ref[...]                                    # (TILE_B, H)
    w = w_ref[...]                                    # (H, C)   resident across grid
    logits = jnp.dot(x, w, preferred_element_type=jnp.float32) + b_ref[...]   # (TILE_B, C) f32
    preds_ref[...] = logits.astype(preds_ref.dtype)

    # --- loss_fn epilogue: per-row cross-entropy NLL (mean reduced outside, megacore-safe) ---
    m = jnp.max(logits, axis=-1, keepdims=True)                               # (TILE_B, 1)
    lse = jnp.log(jnp.sum(jnp.exp(logits - m), axis=-1, keepdims=True))       # (TILE_B, 1)

    labels = y_ref[...]                                                       # (TILE_B, 1) int32
    col = jax.lax.broadcasted_iota(jnp.int32, logits.shape, 1)                # (TILE_B, C)
    picked = jnp.sum(jnp.where(col == labels, logits, 0.0),
                     axis=-1, keepdims=True)                                  # (TILE_B, 1)
    nll = (m + lse) - picked                                                  # (TILE_B, 1)

    if batch % tile_b != 0:
        # Edge block: x rows >= batch are unspecified garbage -> zero their NLL (also squelches
        # any NaN/inf from garbage logits) so the outside sum/B is exact.
        row = (pl.program_id(0) * tile_b
               + jax.lax.broadcasted_iota(jnp.int32, (tile_b, 1), 0))
        nll = jnp.where(row < batch, nll, 0.0)

    nll_ref[...] = nll


def wrap_model_forward(x, w, b, labels, *, tile_b=1024, mxu_dtype="auto"):
    """WrapModel.forward with a loss_fn: returns (loss, preds).

    tile_b:    batch rows per grid step (clamped to the batch, aligned to the sublane packing).
    mxu_dtype: dtype fed to the MXU / DMA'd from HBM for x and W.  "auto" -> bf16 when B >= 1024
               (HBM-bandwidth win; best if the caller already produces bf16 x), else f32.
               Accumulation is always f32.
    """
    B, H = x.shape
    C = w.shape[1]

    if mxu_dtype == "auto":
        mxu_dtype = jnp.bfloat16 if B >= 1024 else None
    if mxu_dtype is not None:
        x = x.astype(mxu_dtype)
        w = w.astype(mxu_dtype)

    x_itemsize = jnp.dtype(x.dtype).itemsize
    # Sublane packing: f32 -> 8 rows, bf16 -> 16, int8/fp8 -> 32.
    row_align = 8 if x_itemsize >= 4 else (16 if x_itemsize == 2 else 32)

    tile_b = _ceil_to(max(int(tile_b), row_align), row_align)
    tile_b = min(tile_b, _ceil_to(B, row_align))            # never bigger than one padded batch
    if B >= 2 * row_align:
        # v7x megacore: keep at least 2 grid steps so both TensorCores get work.
        tile_b = min(tile_b, _ceil_to(-(-B // 2), row_align))
    num_tiles = -(-B // tile_b)

    b2d = b.reshape(1, C).astype(jnp.float32)
    y2d = labels.reshape(B, 1).astype(jnp.int32)

    kernel = functools.partial(_wrap_model_kernel, batch=B, tile_b=tile_b)

    # Advisory cost: tiny flops, mem-bound.
    w_itemsize = jnp.dtype(w.dtype).itemsize
    bytes_accessed = int(B * H * x_itemsize      # x read
                         + B * C * 4             # preds write
                         + B * (4 + 4)           # labels read + nll write
                         + H * C * w_itemsize + C * 4)
    cost = pl.CostEstimate(flops=2 * B * H * C,
                           transcendentals=B * C,
                           bytes_accessed=bytes_accessed)

    cp_kwargs = dict(dimension_semantics=("parallel",))
    # Double-buffered tile footprint; only very large tile_b trips v5e's 16 MiB scoped default.
    vmem_est = (2 * (tile_b * H * x_itemsize + tile_b * C * 4 + 2 * tile_b * 4)
                + 2 * (H * C * w_itemsize + C * 4))
    if vmem_est > 12 * 1024 * 1024:
        cp_kwargs["vmem_limit_bytes"] = min(64 * 1024 * 1024, int(vmem_est * 2))

    preds, nll = pl.pallas_call(
        kernel,
        out_shape=(
            jax.ShapeDtypeStruct((B, C), jnp.float32),   # preds (logits)
            jax.ShapeDtypeStruct((B, 1), jnp.float32),   # per-row NLL
        ),
        grid_spec=pltpu.PrefetchScalarGridSpec(
            num_scalar_prefetch=0,
            grid=(num_tiles,),
            in_specs=[
                pl.BlockSpec((tile_b, H), lambda i: (i, 0)),   # x tile (pipelined)
                pl.BlockSpec((H, C), lambda i: (0, 0)),        # W resident across grid
                pl.BlockSpec((1, C), lambda i: (0, 0)),        # bias resident across grid
                pl.BlockSpec((tile_b, 1), lambda i: (i, 0)),   # labels tile
            ],
            out_specs=(
                pl.BlockSpec((tile_b, C), lambda i: (i, 0)),   # preds tile (ragged edge masked)
                pl.BlockSpec((tile_b, 1), lambda i: (i, 0)),   # NLL tile
            ),
        ),
        compiler_params=pltpu.CompilerParams(**cp_kwargs),
        cost_estimate=cost,
    )(x, w, b2d, y2d)

    # Mean over the true batch size (edge-garbage rows were zeroed in-kernel / never written).
    loss = jnp.sum(nll) / B
    return loss, preds


def reference_forward(x, w, b, labels):
    logits = jnp.dot(x, w, precision=jax.lax.Precision.HIGHEST) + b[None, :]
    logp = jax.nn.log_softmax(logits, axis=-1)
    nll = -jnp.take_along_axis(logp, labels[:, None].astype(jnp.int32), axis=-1)[:, 0]
    return jnp.mean(nll), logits


if __name__ == "__main__":
    # Small shapes; B=20 is not a multiple of the tile so the ragged-edge masking path
    # (no wrapper-side padding) and the multi-step pipeline are both exercised.
    B, H, C = 20, 32, 16

    key = jax.random.PRNGKey(0)
    kx, kw, kb, ky = jax.random.split(key, 4)

    x = jax.random.normal(kx, (B, H), dtype=jnp.float32)
    # deterministic synthetic parameters (not a checkpoint load)
    w = jax.random.normal(kw, (H, C), dtype=jnp.float32) * 0.05
    b = jax.random.normal(kb, (C,), dtype=jnp.float32) * 0.01
    labels = jax.random.randint(ky, (B,), 0, C, dtype=jnp.int32)

    ref_loss, ref_preds = reference_forward(x, w, b, labels)

    # Default path (auto -> f32 at this batch size, tile_b auto-clamped -> 2 ragged grid steps).
    loss, preds = wrap_model_forward(x, w, b, labels)
    jax.block_until_ready((loss, preds))
    assert preds.shape == (B, C)
    assert jnp.allclose(preds, ref_preds, atol=1e-4, rtol=1e-4)
    assert jnp.allclose(loss, ref_loss, atol=1e-4, rtol=1e-4)

    # Small explicit tile (3 grid steps, ragged last block of 4 rows).
    loss8, preds8 = wrap_model_forward(x, w, b, labels, tile_b=8, mxu_dtype=None)
    jax.block_until_ready((loss8, preds8))
    assert jnp.allclose(preds8, ref_preds, atol=1e-4, rtol=1e-4)
    assert jnp.allclose(loss8, ref_loss, atol=1e-4, rtol=1e-4)

    # bf16-fed MXU/HBM path (default for large batches); tile rounds to a multiple of 16,
    # f32 accumulation, so only input-rounding error remains -> looser tolerance.
    loss_bf, preds_bf = wrap_model_forward(x, w, b, labels, tile_b=8,
                                           mxu_dtype=jnp.bfloat16)
    jax.block_until_ready((loss_bf, preds_bf))
    assert jnp.allclose(preds_bf, ref_preds, atol=5e-2, rtol=5e-2)
    assert jnp.allclose(loss_bf, ref_loss, atol=5e-2, rtol=5e-2)

    print("KERNEL_OK")
</pallas_src>

<mosaic_0001>
module attributes {stable_mosaic.version = 11 : i64} {
  func.func @_wrap_model_kernel(%arg0: i32, %arg1: memref<16x32xf32, #tpu.memory_space<vmem>>, %arg2: memref<32x16xf32, #tpu.memory_space<vmem>>, %arg3: memref<1x16xf32, #tpu.memory_space<vmem>>, %arg4: memref<16x1xi32, #tpu.memory_space<vmem>>, %arg5: memref<16x16xf32, #tpu.memory_space<vmem>>, %arg6: memref<16x1xf32, #tpu.memory_space<vmem>>) attributes {dimension_semantics = [#tpu.dimension_semantics<parallel>], iteration_bounds = array<i64: 2>, scalar_prefetch = 0 : i64, scratch_operands = 0 : i64, tpu.core_type = #tpu.core_type<tc>, window_params = [{transform_indices = @transform_0, window_bounds = array<i64: 16, 32>}, {pipeline_mode = #tpu.pipeline_mode<synchronous>, transform_indices = @transform_1, window_bounds = array<i64: 32, 16>}, {pipeline_mode = #tpu.pipeline_mode<synchronous>, transform_indices = @transform_2, window_bounds = array<i64: 1, 16>}, {transform_indices = @transform_3, window_bounds = array<i64: 16, 1>}, {transform_indices = @transform_4, window_bounds = array<i64: 16, 16>}, {transform_indices = @transform_5, window_bounds = array<i64: 16, 1>}]} {
    %c0 = arith.constant 0 : index
    %c0_0 = arith.constant 0 : index
    %0 = vector.load %arg1[%c0, %c0_0] : memref<16x32xf32, #tpu.memory_space<vmem>>, vector<16x32xf32>
    %c0_1 = arith.constant 0 : index
    %c0_2 = arith.constant 0 : index
    %1 = vector.load %arg2[%c0_1, %c0_2] : memref<32x16xf32, #tpu.memory_space<vmem>>, vector<32x16xf32>
    %cst = arith.constant dense<0.000000e+00> : vector<16x16xf32>
    %2 = tpu.matmul %0, %1, %cst {dimension_numbers = #tpu.dot_dimension_numbers<[1], [0], [0], [1], [0, 0, 1, 1], [], []>} : vector<16x32xf32>, vector<32x16xf32>, vector<16x16xf32> -> vector<16x16xf32>
    %c0_3 = arith.constant 0 : index
    %c0_4 = arith.constant 0 : index
    %3 = vector.load %arg3[%c0_3, %c0_4] : memref<1x16xf32, #tpu.memory_space<vmem>>, vector<1x16xf32>
    %4 = vector.broadcast %3 : vector<1x16xf32> to vector<16x16xf32>
    %5 = arith.addf %2, %4 : vector<16x16xf32>
    %c0_5 = arith.constant 0 : index
    %c0_6 = arith.constant 0 : index
    %6 = vector.load %arg5[%c0_5, %c0_6] : memref<16x16xf32, #tpu.memory_space<vmem>>, vector<16x16xf32>
    tpu.vector_store %arg5[%c0_5, %c0_6], %5 {strides = array<i32>} : memref<16x16xf32, #tpu.memory_space<vmem>>, vector<16x16xf32>,
    %cst_7 = arith.constant dense<0xFF800000> : vector<16xf32>
    %7 = vector.multi_reduction <maximumf>, %5, %cst_7 [1] : vector<16x16xf32> to vector<16xf32>
    %8 = vector.shape_cast %7 : vector<16xf32> to vector<16x1xf32>
    %9 = vector.broadcast %8 : vector<16x1xf32> to vector<16x16xf32>
    %10 = arith.subf %5, %9 : vector<16x16xf32>
    %11 = math.exp %10 : vector<16x16xf32>
    %cst_8 = arith.constant dense<0.000000e+00> : vector<16xf32>
    %12 = vector.multi_reduction <add>, %11, %cst_8 [1] : vector<16x16xf32> to vector<16xf32>
    %13 = vector.shape_cast %12 : vector<16xf32> to vector<16x1xf32>
    %14 = math.log %13 : vector<16x1xf32>
    %c0_9 = arith.constant 0 : index
    %c0_10 = arith.constant 0 : index
    %15 = vector.load %arg4[%c0_9, %c0_10] : memref<16x1xi32, #tpu.memory_space<vmem>>, vector<16x1xi32>
    %16 = tpu.iota {dimensions = array<i32: 1>} : vector<16x16xi32>
    %17 = vector.broadcast %15 : vector<16x1xi32> to vector<16x16xi32>
    %18 = arith.cmpi eq, %16, %17 : vector<16x16xi32>
    %cst_11 = arith.constant 0.000000e+00 : f32
    %19 = vector.broadcast %cst_11 : f32 to vector<16x16xf32>
    %20 = arith.select %18, %5, %19 : vector<16x16xi1>, vector<16x16xf32>
    %cst_12 = arith.constant dense<0.000000e+00> : vector<16xf32>
    %21 = vector.multi_reduction <add>, %20, %cst_12 [1] : vector<16x16xf32> to vector<16xf32>
    %22 = vector.shape_cast %21 : vector<16xf32> to vector<16x1xf32>
    %23 = arith.addf %8, %14 : vector<16x1xf32>
    %24 = arith.subf %23, %22 : vector<16x1xf32>
    %c16_i32 = arith.constant 16 : i32
    %25 = arith.muli %arg0, %c16_i32 : i32
    %26 = tpu.iota {dimensions = array<i32: 0>} : vector<16x1xi32>
    %27 = vector.broadcast %25 : i32 to vector<16x1xi32>
    %28 = arith.addi %27, %26 : vector<16x1xi32>
    %c20_i32 = arith.constant 20 : i32
    %29 = vector.broadcast %c20_i32 : i32 to vector<16x1xi32>
    %30 = arith.cmpi slt, %28, %29 : vector<16x1xi32>
    %cst_13 = arith.constant 0.000000e+00 : f32
    %31 = vector.broadcast %cst_13 : f32 to vector<16x1xf32>
    %32 = arith.select %30, %24, %31 : vector<16x1xi1>, vector<16x1xf32>
    %c0_14 = arith.constant 0 : index
    %c0_15 = arith.constant 0 : index
    %33 = vector.load %arg6[%c0_14, %c0_15] : memref<16x1xf32, #tpu.memory_space<vmem>>, vector<16x1xf32>
    tpu.vector_store %arg6[%c0_14, %c0_15], %32 {strides = array<i32>} : memref<16x1xf32, #tpu.memory_space<vmem>>, vector<16x1xf32>,
    return
  }
  func.func @transform_0(%arg0: i32) -> (i32, i32) {
    %c0_i32 = arith.constant 0 : i32
    %c0_i32_0 = arith.constant 0 : i32
    return %arg0, %c0_i32 : i32, i32
  }
  func.func @transform_1(%arg0: i32) -> (i32, i32) {
    %c0_i32 = arith.constant 0 : i32
    %c0_i32_0 = arith.constant 0 : i32
    %c0_i32_1 = arith.constant 0 : i32
    return %c0_i32, %c0_i32_0 : i32, i32
  }
  func.func @transform_2(%arg0: i32) -> (i32, i32) {
    %c0_i32 = arith.constant 0 : i32
    %c0_i32_0 = arith.constant 0 : i32
    %c0_i32_1 = arith.constant 0 : i32
    return %c0_i32, %c0_i32_0 : i32, i32
  }
  func.func @transform_3(%arg0: i32) -> (i32, i32) {
    %c0_i32 = arith.constant 0 : i32
    %c0_i32_0 = arith.constant 0 : i32
    return %arg0, %c0_i32 : i32, i32
  }
  func.func @transform_4(%arg0: i32) -> (i32, i32) {
    %c0_i32 = arith.constant 0 : i32
    %c0_i32_0 = arith.constant 0 : i32
    return %arg0, %c0_i32 : i32, i32
  }
  func.func @transform_5(%arg0: i32) -> (i32, i32) {
    %c0_i32 = arith.constant 0 : i32
    %c0_i32_0 = arith.constant 0 : i32
    return %arg0, %c0_i32 : i32, i32
  }
}

</mosaic_0001>

<llo_original>
// kernel: tpu_custom_call.1
$region0: #{tpu_custom_call.1}
  #allocation0 [shape = 'u32[]', space=smem, size = 0x4, offset = 0x4, fixed_abs, tag = 'smem constant byte address 0x4 - core index']
  #allocation1 [shape = 'u32[144,128]{1,0:T(1,128)}', space=vmem, size = 0x12000, scoped, tag = 'internal scratch']
  %s0 = inlined_call_operand.vmem [shape: f32[20,32], index: 0, kind: input, shape index: {}]
  %s1 = inlined_call_operand.vmem [shape: f32[32,16], index: 1, kind: input, shape index: {}]
  %s2 = inlined_call_operand.vmem [shape: f32[1,16], index: 2, kind: input, shape index: {}]
  %s3 = inlined_call_operand.vmem [shape: s32[20,1], index: 3, kind: input, shape index: {}]
  %s4 = inlined_call_operand.vmem [shape: f32[20,16], index: 4, kind: output, shape index: {0}]
  %s5 = inlined_call_operand.vmem [shape: f32[20,1], index: 5, kind: output, shape index: {1}]
  %6 = xla_tuple %s4, %s5
  %s7 = sld [smem:[#allocation0]]
  $region153: #{tpu_custom_call.1} parent=0
    _
  %s9 = ssub.s32 1, %s7
  %s10 = scalar_select 0, %s9, %s7
  $region1: #{tpu_custom_call.1} parent=0
    #allocation2 [shape = 'u8[16384]{0}', space=vmem, size = 0x4000, scoped, tag = 'output window, operand 0']
    #allocation3 [shape = 'u8[16384]{0}', space=vmem, size = 0x4000, scoped, tag = 'output window, operand 1']
    loop: start=0, step=1, limit=4
    $region2: #{tpu_custom_call.1} parent=1 // loop_pre_header
      _
    $region3: #{tpu_custom_call.1} parent=1 // loop_header
      %s12 = sphi 0, %s16
      %p13 = scmp.ge.s32.totalorder %s12, 4
      %s22 = sphi 0, %s24
      %s25 = sphi 0, %s22
      %s26 = sphi 0, %s25
      %s42 = sphi 0, %s26
      %s46 = sphi 0, %s46
      %s48 = sphi 0, %s46
      %s49 = sphi 0, %s48
      %s63 = sphi 0, %s49
      %s67 = sphi 0, %s67
      %s69 = sphi 0, %s67
      %s70 = sphi 0, %s69
      %s84 = sphi 0, %s70
      %s90 = sphi 0, %s92
      %s93 = sphi 0, %s90
      %s94 = sphi 0, %s93
      %s110 = sphi 0, %s94
      %s116 = sphi 0, %s118
      %s119 = sphi 0, %s116
      %s120 = sphi 0, %s119
      %s136 = sphi 0, %s120
      %s142 = sphi 0, %s144
      %s145 = sphi 0, %s142
      %s146 = sphi 0, %s145
      %s162 = sphi 0, %s146
    $region4: #{tpu_custom_call.1} parent=1 // loop_header_branch
      %15 = sbr.rel (%p13) target = $region8
    $region5: #{tpu_custom_call.1} parent=1 // loop_body
      %s17 = ssub.s32 %s12, 1
      %s18 = ssub.s32 %s12, 2
      %s19 = sadd.s32 %s12, 1
      %s20 = ssub.s32 %s12, %s19
      %p21 = scmp.eq.s32.totalorder %s20, 0
      %s23 = sadd.s32 %s22, 1
      %s24 = scalar_select %p21, %s22, %s23
      %p27 = pneg %p21
      %p28 = scmp.eq.s32.totalorder %s12, 1
      %p29 = por %p27, %p28
      %p30 = scmp.ne.s32.totalorder %s22, %s25
      %p31 = scmp.eq.s32.totalorder %s12, 0
      %p32 = por %p30, %p31
      %p33 = scmp.ne.s32.totalorder %s22, %s25
      %p34 = scmp.eq.s32.totalorder %s17, 1
      %p35 = por %p33, %p34
      %p36 = scmp.ne.s32.totalorder %s25, %s26
      %p37 = scmp.eq.s32.totalorder %s17, 0
      %p38 = por %p36, %p37
      %p39 = scmp.ne.s32.totalorder %s25, %s26
      %p40 = scmp.eq.s32.totalorder %s18, 1
      %p41 = por %p39, %p40
      %p43 = scmp.ne.s32.totalorder %s26, %s42
      %p44 = scmp.eq.s32.totalorder %s18, 0
      %p45 = por %p43, %p44
      %s47 = sadd.s32 %s46, 1
      %p50 = scmp.eq.s32.totalorder %s12, 1
      %p51 = scmp.ne.s32.totalorder %s46, %s48
      %p52 = scmp.eq.s32.totalorder %s12, 0
      %p53 = por %p51, %p52
      %p54 = scmp.ne.s32.totalorder %s46, %s48
      %p55 = scmp.eq.s32.totalorder %s17, 1
      %p56 = por %p54, %p55
      %p57 = scmp.ne.s32.totalorder %s48, %s49
      %p58 = scmp.eq.s32.totalorder %s17, 0
      %p59 = por %p57, %p58
      %p60 = scmp.ne.s32.totalorder %s48, %s49
      %p61 = scmp.eq.s32.totalorder %s18, 1
      %p62 = por %p60, %p61
      %p64 = scmp.ne.s32.totalorder %s49, %s63
      %p65 = scmp.eq.s32.totalorder %s18, 0
      %p66 = por %p64, %p65
      %s68 = sadd.s32 %s67, 1
      %p71 = scmp.eq.s32.totalorder %s12, 1
      %p72 = scmp.ne.s32.totalorder %s67, %s69
      %p73 = scmp.eq.s32.totalorder %s12, 0
      %p74 = por %p72, %p73
      %p75 = scmp.ne.s32.totalorder %s67, %s69
      %p76 = scmp.eq.s32.totalorder %s17, 1
      %p77 = por %p75, %p76
      %p78 = scmp.ne.s32.totalorder %s69, %s70
      %p79 = scmp.eq.s32.totalorder %s17, 0
      %p80 = por %p78, %p79
      %p81 = scmp.ne.s32.totalorder %s69, %s70
      %p82 = scmp.eq.s32.totalorder %s18, 1
      %p83 = por %p81, %p82
      %p85 = scmp.ne.s32.totalorder %s70, %s84
      %p86 = scmp.eq.s32.totalorder %s18, 0
      %p87 = por %p85, %p86
      %s88 = ssub.s32 %s12, %s19
      %p89 = scmp.eq.s32.totalorder %s88, 0
      %s91 = sadd.s32 %s90, 1
      %s92 = scalar_select %p89, %s90, %s91
      %p95 = pneg %p89
      %p96 = scmp.eq.s32.totalorder %s12, 1
      %p97 = por %p95, %p96
      %p98 = scmp.ne.s32.totalorder %s90, %s93
      %p99 = scmp.eq.s32.totalorder %s12, 0
      %p100 = por %p98, %p99
      %p101 = scmp.ne.s32.totalorder %s90, %s93
      %p102 = scmp.eq.s32.totalorder %s17, 1
      %p103 = por %p101, %p102
      %p104 = scmp.ne.s32.totalorder %s93, %s94
      %p105 = scmp.eq.s32.totalorder %s17, 0
      %p106 = por %p104, %p105
      %p107 = scmp.ne.s32.totalorder %s93, %s94
      %p108 = scmp.eq.s32.totalorder %s18, 1
      %p109 = por %p107, %p108
      %p111 = scmp.ne.s32.totalorder %s94, %s110
      %p112 = scmp.eq.s32.totalorder %s18, 0
      %p113 = por %p111, %p112
      %s114 = ssub.s32 %s12, %s19
      %p115 = scmp.eq.s32.totalorder %s114, 0
      %s117 = sadd.s32 %s116, 1
      %s118 = scalar_select %p115, %s116, %s117
      %p121 = pneg %p115
      %p122 = scmp.eq.s32.totalorder %s12, 1
      %p123 = por %p121, %p122
      %p124 = scmp.ne.s32.totalorder %s116, %s119
      %p125 = scmp.eq.s32.totalorder %s12, 0
      %p126 = por %p124, %p125
      %p127 = scmp.ne.s32.totalorder %s116, %s119
      %p128 = scmp.eq.s32.totalorder %s17, 1
      %p129 = por %p127, %p128
      %p130 = scmp.ne.s32.totalorder %s119, %s120
      %p131 = scmp.eq.s32.totalorder %s17, 0
      %p132 = por %p130, %p131
      %p133 = scmp.ne.s32.totalorder %s119, %s120
      %p134 = scmp.eq.s32.totalorder %s18, 1
      %p135 = por %p133, %p134
      %p137 = scmp.ne.s32.totalorder %s120, %s136
      %p138 = scmp.eq.s32.totalorder %s18, 0
      %p139 = por %p137, %p138
      %s140 = ssub.s32 %s12, %s19
      %p141 = scmp.eq.s32.totalorder %s140, 0
      %s143 = sadd.s32 %s142, 1
      %s144 = scalar_select %p141, %s142, %s143
      %p147 = pneg %p141
      %p148 = scmp.eq.s32.totalorder %s12, 1
      %p149 = por %p147, %p148
      %p150 = scmp.ne.s32.totalorder %s142, %s145
      %p151 = scmp.eq.s32.totalorder %s12, 0
      %p152 = por %p150, %p151
      %p153 = scmp.ne.s32.totalorder %s142, %s145
      %p154 = scmp.eq.s32.totalorder %s17, 1
      %p155 = por %p153, %p154
      %p156 = scmp.ne.s32.totalorder %s145, %s146
      %p157 = scmp.eq.s32.totalorder %s17, 0
      %p158 = por %p156, %p157
      %p159 = scmp.ne.s32.totalorder %s145, %s146
      %p160 = scmp.eq.s32.totalorder %s18, 1
      %p161 = por %p159, %p160
      %p163 = scmp.ne.s32.totalorder %s146, %s162
      %p164 = scmp.eq.s32.totalorder %s18, 0
      %p165 = por %p163, %p164
      %p166 = scmp.le.s32.totalorder 1, %s12
      %p167 = scmp.lt.s32.totalorder %s12, 3
      %p168 = pnand %p166, %p167
      %p169 = pneg %p168
      // Predicated region
      $region9: #{tpu_custom_call.1} parent=5 // pred_check
        _
      $region10: #{tpu_custom_call.1} parent=5 // pred_check_branch
        %171 = sbr.rel (%p168) target = $region12
      $region11: #{tpu_custom_call.1} parent=5 // pred_region
        %s172 = ssub.s32 %s12, 1
        // Predicated region
        $region13: #{tpu_custom_call.1} parent=11 // pred_check
          %p173 = pneg %p59
        $region14: #{tpu_custom_call.1} parent=11 // pred_check_branch
          %175 = sbr.rel (%p173) target = $region16
        $region15: #{tpu_custom_call.1} parent=11 // pred_region
          _
        $region16: #{tpu_custom_call.1} parent=11 // pred_fallthru
          _
        // Predicated region
        $region17: #{tpu_custom_call.1} parent=11 // pred_check
          %p176 = pneg %p80
        $region18: #{tpu_custom_call.1} parent=11 // pred_check_branch
          %178 = sbr.rel (%p176) target = $region20
        $region19: #{tpu_custom_call.1} parent=11 // pred_region
          _
        $region20: #{tpu_custom_call.1} parent=11 // pred_fallthru
          _
      $region12: #{tpu_custom_call.1} parent=5 // pred_fallthru
        _
      %p179 = scmp.lt.s32.totalorder %s12, 2
      // Predicated region
      $region21: #{tpu_custom_call.1} parent=5 // pred_check
        %p180 = pneg %p179
      $region22: #{tpu_custom_call.1} parent=5 // pred_check_branch
        %182 = sbr.rel (%p180) target = $region24
      $region23: #{tpu_custom_call.1} parent=5 // pred_region
        // Predicated region
        $region25: #{tpu_custom_call.1} parent=23 // pred_check
          %p183 = pneg %p32
        $region26: #{tpu_custom_call.1} parent=23 // pred_check_branch
          %185 = sbr.rel (%p183) target = $region28
        $region27: #{tpu_custom_call.1} parent=23 // pred_region
          %s186 = smul.u32 2, %s12
          %s187 = ssub.s32 3, %s186
          %p188 = scmp.lt.s32.totalorder %s187, 2
          %s189 = scalar_select %p188, %s187, 2
          %s190 = smul.u32 128, %s189
          %p191 = scmp.lt.s32.totalorder %s186, 2
          %s192 = scalar_select %p191, %s186, 2
          %s193 = smul.addr %s192, 8
          %s194 = scalar_lea.vmem %s0, %s193
          %s195 = smul.u32 2, %s12
          %s196 = ssub.s32 3, %s195
          %p197 = scmp.lt.s32.totalorder %s196, 2
          %s198 = scalar_select %p197, %s196, 2
          %s199 = smul.u32 128, %s198
        $region28: #{tpu_custom_call.1} parent=23 // pred_fallthru
          _
        // Predicated region
        $region29: #{tpu_custom_call.1} parent=23 // pred_check
          %p200 = pneg %p100
        $region30: #{tpu_custom_call.1} parent=23 // pred_check_branch
          %202 = sbr.rel (%p200) target = $region32
        $region31: #{tpu_custom_call.1} parent=23 // pred_region
          %s203 = smul.u32 2, %s12
          %s204 = ssub.s32 3, %s203
          %p205 = scmp.lt.s32.totalorder %s204, 2
          %s206 = scalar_select %p205, %s204, 2
          %s207 = smul.u32 128, %s206
          %p208 = scmp.lt.s32.totalorder %s203, 2
          %s209 = scalar_select %p208, %s203, 2
          %s210 = smul.addr %s209, 8
          %s211 = scalar_lea.vmem %s3, %s210
          %s212 = smul.u32 2, %s12
          %s213 = ssub.s32 3, %s212
          %p214 = scmp.lt.s32.totalorder %s213, 2
          %s215 = scalar_select %p214, %s213, 2
          %s216 = smul.u32 128, %s215
        $region32: #{tpu_custom_call.1} parent=23 // pred_fallthru
          _
      $region24: #{tpu_custom_call.1} parent=5 // pred_fallthru
        _
      %p217 = scmp.le.s32.totalorder 1, %s12
      %p218 = scmp.lt.s32.totalorder %s12, 3
      %p219 = pnand %p217, %p218
      %p220 = pneg %p219
      // Predicated region
      $region33: #{tpu_custom_call.1} parent=5 // pred_check
        _
      $region34: #{tpu_custom_call.1} parent=5 // pred_check_branch
        %222 = sbr.rel (%p219) target = $region36
      $region35: #{tpu_custom_call.1} parent=5 // pred_region
        %s223 = ssub.s32 %s12, 1
        %s224 = smul.u32 2, %s17
        %s225 = ssub.s32 3, %s224
        %p226 = scmp.lt.s32.totalorder %s225, 2
        %s227 = scalar_select %p226, %s225, 2
        %s228 = smul.u32 128, %s227
        %p229 = scmp.lt.s32.totalorder %s224, 2
        %s230 = scalar_select %p229, %s224, 2
        %s231 = smul.addr %s230, 8
        %s232 = scalar_lea.vmem %s0, %s231
        %p233 = pneg %p38
        %p234 = pneg %p35
        %p235 = pneg %p59
        %p236 = pneg %p56
        %p237 = pneg %p80
        %p238 = pneg %p77
        %s239 = smul.u32 2, %s17
        %s240 = ssub.s32 3, %s239
        %p241 = scmp.lt.s32.totalorder %s240, 2
        %s242 = scalar_select %p241, %s240, 2
        %s243 = smul.u32 128, %s242
        %p244 = scmp.lt.s32.totalorder %s239, 2
        %s245 = scalar_select %p244, %s239, 2
        %s246 = smul.addr %s245, 8
        %s247 = scalar_lea.vmem %s3, %s246
        %p248 = pneg %p106
        %p249 = pneg %p103
        %p250 = pneg %p132
        %p251 = pneg %p129
        %s252 = sand.u32 %s119, 1
        %s253 = sand.u32 %s119, 1
        %s254 = smul.addr %s253, 16
        %s255 = scalar_lea.vmem [#allocation2], %s254
        %p256 = pneg %p158
        %p257 = pneg %p155
        %s258 = sand.u32 %s145, 1
        %s259 = sand.u32 %s145, 1
        %s260 = smul.addr %s259, 16
        %s261 = scalar_lea.vmem [#allocation3], %s260
        %s262 = smul.u32 2, %s17
        %s263 = ssub.s32 3, %s262
        %p264 = scmp.lt.s32.totalorder %s263, 2
        %s265 = scalar_select %p264, %s263, 2
        %s266 = smul.u32 128, %s265
        %p267 = scmp.lt.s32.totalorder %s262, 2
        %s268 = scalar_select %p267, %s262, 2
        %s269 = smul.addr %s268, 8
        %s270 = scalar_lea.vmem %s0, %s269
        %s271 = smul.u32 2, %s17
        %s272 = ssub.s32 3, %s271
        %p273 = scmp.lt.s32.totalorder %s272, 2
        %s274 = scalar_select %p273, %s272, 2
        %s275 = smul.u32 128, %s274
        %s276 = smul.u32 2, %s17
        %s277 = ssub.s32 3, %s276
        %p278 = scmp.lt.s32.totalorder %s277, 2
        %s279 = scalar_select %p278, %s277, 2
        %s280 = smul.u32 128, %s279
        %p281 = scmp.lt.s32.totalorder %s276, 2
        %s282 = scalar_select %p281, %s276, 2
        %s283 = smul.addr %s282, 8
        %s284 = scalar_lea.vmem %s3, %s283
        %s285 = smul.u32 2, %s17
        %s286 = ssub.s32 3, %s285
        %p287 = scmp.lt.s32.totalorder %s286, 2
        %s288 = scalar_select %p287, %s286, 2
        %s289 = smul.u32 128, %s288
        %s290 = smul.u32 2, %s17
        %s291 = ssub.s32 3, %s290
        %p292 = scmp.lt.s32.totalorder %s291, 2
        %s293 = scalar_select %p292, %s291, 2
        %s294 = smul.u32 128, %s293
        %s295 = smul.u32 2, %s17
        %s296 = ssub.s32 3, %s295
        %p297 = scmp.lt.s32.totalorder %s296, 2
        %s298 = scalar_select %p297, %s296, 2
        %s299 = smul.u32 128, %s298
        %v300 = vld [vmem:[%s270] sm:$0xff]
        %v301 = vld [vmem:[%s270 + $0x8] sm:$0xff]
        %v302 = vld [vmem:[%s1] sm:$0xff]
        %v303 = vld [vmem:[%s1 + $0x8] sm:$0xff]
        %v304 = vld [vmem:[%s1 + $0x10] sm:$0xff]
        %v305 = vld [vmem:[%s1 + $0x18] sm:$0xff]
        %v306 = vld [vmem:[%s2] sm:$0x1]
        %v308 = vlaneseq
        %v309 = vshrl.u32 %v308, 7
        %v310 = vsub.s32 0, %v309
        %v311 = vrot.slane %v306, %v310
        %vm313 = vcmask 261120
        %v315 = vsel %vm313, %v300, 0
        %v318 = vsel %vm313, %v301, 0
        %320 = vmatprep.subr.mxu0 0.0
        %321 = vmatpush1.msra.mxu0 %v302
        %322 = vmatprep.subr.mxu0 0.0
        %323 = vmatpush1.msra.mxu0 %v303
        %324 = vmatprep.subr.mxu0 0.0
        %325 = vmatpush1.msra.mxu0 %v304
        %326 = vmatprep.subr.mxu0 0.0
        %327 = vmatpush1.msra.mxu0 %v305
        %328 = vmatprep.subr.mxu0 0.0
        %329 = vmatpush1.msra.mxu0 0.0
        %330 = vmatprep.subr.mxu0 0.0
        %331 = vmatpush1.msra.mxu0 0.0
        %332 = vmatprep.subr.mxu0 0.0
        %333 = vmatpush1.msra.mxu0 0.0
        %334 = vmatprep.subr.mxu0 0.0
        %335 = vmatpush1.msra.mxu0 0.0
        %336 = vmatprep.subr.mxu0 0.0
        %337 = vmatpush1.msra.mxu0 0.0
        %338 = vmatprep.subr.mxu0 0.0
        %339 = vmatpush1.msra.mxu0 0.0
        %340 = vmatprep.subr.mxu0 0.0
        %341 = vmatpush1.msra.mxu0 0.0
        %342 = vmatprep.subr.mxu0 0.0
        %343 = vmatpush1.msra.mxu0 0.0
        %344 = vmatprep.subr.mxu0 0.0
        %345 = vmatpush1.msra.mxu0 0.0
        %346 = vmatprep.subr.mxu0 0.0
        %347 = vmatpush1.msra.mxu0 0.0
        %348 = vmatprep.subr.mxu0 0.0
        %349 = vmatpush1.msra.mxu0 0.0
        %350 = vmatprep.subr.mxu0 0.0
        %351 = vmatpush1.msra.mxu0 0.0
        %352 = vmatprep.subr.mxu0 0.0
        %353 = vmatpush1.msra.mxu0 0.0
        %354 = vmatprep.subr.mxu0 0.0
        %355 = vmatpush1.msra.mxu0 0.0
        %356 = vmatprep.subr.mxu0 0.0
        %357 = vmatpush1.msra.mxu0 0.0
        %358 = vmatprep.subr.mxu0 0.0
        %359 = vmatpush1.msra.mxu0 0.0
        %360 = vmatprep.subr.mxu0 0.0
        %361 = vmatpush1.msra.mxu0 0.0
        %362 = vmatprep.subr.mxu0 0.0
        %363 = vmatpush1.msra.mxu0 0.0
        %364 = vmatprep.subr.mxu0 0.0
        %365 = vmatpush1.msra.mxu0 0.0
        %366 = vmatprep.subr.mxu0 0.0
        %367 = vmatpush1.msra.mxu0 0.0
        %368 = vmatprep.subr.mxu0 0.0
        %369 = vmatpush1.msra.mxu0 0.0
        %370 = vmatprep.subr.mxu0 0.0
        %371 = vmatpush1.msra.mxu0 0.0
        %372 = vmatprep.subr.mxu0 0.0
        %373 = vmatpush1.msra.mxu0 0.0
        %374 = vmatprep.subr.mxu0 0.0
        %375 = vmatpush1.msra.mxu0 0.0
        %376 = vmatprep.subr.mxu0 0.0
        %377 = vmatpush1.msra.mxu0 0.0
        %378 = vmatprep.subr.mxu0 0.0
        %379 = vmatpush1.msra.mxu0 0.0
        %380 = vmatprep.subr.mxu0 0.0
        %381 = vmatpush1.msra.mxu0 0.0
        %382 = vmatprep.subr.mxu0 0.0
        %383 = vmatpush1.msra.mxu0 0.0
        %384 = vmatprep.mubr.f32.mxu0 0.0
        %385 = vmatmul.mubr.f32.gmra.mrb[0].mxu0 %v315
        %v386 = vpop.f32.mrb[0].mxu0
        %v387 = vadd.f32 %v311, %v386
        %v388 = vpop.f32.mrb[0].mxu0
        %389 = vmatprep.mubr.f32.mxu0 0.0
        %390 = vmatmul.mubr.f32.gmra.mrb[0].mxu0 %v318
        %v391 = vpop.f32.mrb[0].mxu0
        %v392 = vadd.f32 %v311, %v391
        %v393 = vpop.f32.mrb[0].mxu0
        %394 = vdwg.mxu0
        %vm395 = vcmask 130048
        %396 = vst.msk [vmem:[%s255] sm:$0xff] %vm395, %v387
        %397 = vst.msk [vmem:[%s255 + $0x8] sm:$0xff] %vm395, %v392
        %v398 = vsel %vm395, %v387, -inf
        %399 = vmax.xlane.f32.xlu0 %v398
        %v400 = vpop.xlane.xlu0 %399
        %v401 = vsel %vm395, %v392, -inf
        %402 = vmax.xlane.f32.xlu0 %v401
        %v403 = vpop.xlane.xlu0 %402
        %v404 = vsub.f32 %v387, %v400
        %v405 = vsub.f32 %v392, %v403
        %v406 = vmul.f32 %v404, 1.442695
        %v407 = vpow.pop %v406
        %v408 = vmul.f32 %v405, 1.442695
        %v409 = vpow.pop %v408
        %v410 = vsel %vm395, %v407, 0.0
        %411 = vadd.xlane.f32.xlu0 %v410
        %v412 = vpop.xlane.xlu0 %411
        %v413 = vsel %vm395, %v409, 0.0
        %414 = vadd.xlane.f32.xlu0 %v413
        %v415 = vpop.xlane.xlu0 %414
        %v416 = vlog2.pop %v412
        %v417 = vmul.f32 %v416, 0.6931472
        %v418 = vlog2.pop %v415
        %v419 = vmul.f32 %v418, 0.6931472
        %v420 = vld [vmem:[%s284] sm:$0xff]
        %v421 = vld [vmem:[%s284 + $0x8] sm:$0xff]
        %v422 = vlaneseq
        %v423 = vand.u32 %v422, 127
        %424 = vset.pattern.permute.xlu0 0
        %425 = vperm.xlu0 %424, %v420
        %v426 = vpop.permute.xlu0 %425
        %427 = vset.pattern.permute.xlu0 0
        %428 = vperm.xlu0 %427, %v421
        %v429 = vpop.permute.xlu0 %428
        %vm430 = vcmp.eq.s32.totalorder %v423, %v426
        %vm431 = vcmp.eq.s32.totalorder %v423, %v429
        %v432 = vsel %vm430, %v387, 0.0
        %v433 = vsel %vm431, %v392, 0.0
        %v434 = vsel %vm395, %v432, 0.0
        %435 = vadd.xlane.f32.xlu0 %v434
        %v436 = vpop.xlane.xlu0 %435
        %v437 = vsel %vm395, %v433, 0.0
        %438 = vadd.xlane.f32.xlu0 %v437
        %v439 = vpop.xlane.xlu0 %438
        %v440 = vadd.f32 %v400, %v417
        %v441 = vadd.f32 %v403, %v419
        %v442 = vsub.f32 %v440, %v436
        %v443 = vsub.f32 %v441, %v439
        %s444 = smul.u32 %s17, 16
        %v445 = vlaneseq
        %v446 = vshrl.u32 %v445, 7
        %v447 = vadd.s32 %v446, 8
        %v448 = vstv %s444
        %v449 = vadd.s32 %v448, %v446
        %v450 = vadd.s32 %v448, %v447
        %vm451 = vcmp.lt.s32.totalorder %v449, 20
        %vm452 = vcmp.lt.s32.totalorder %v450, 20
        %v453 = vsel %vm451, %v442, 0.0
        %v454 = vsel %vm452, %v443, 0.0
        %vm455 = vcmask 7168
        %456 = vst.msk [vmem:[%s261] sm:$0xff] %vm455, %v453
        %457 = vst.msk [vmem:[%s261 + $0x8] sm:$0xff] %vm455, %v454
        %s458 = sand.u32 %s119, 1
        %s459 = sand.u32 %s119, 1
        %s460 = smul.addr %s459, 16
        %s461 = scalar_lea.vmem [#allocation2], %s460
        %s462 = sand.u32 %s145, 1
        %s463 = sand.u32 %s145, 1
        %s464 = smul.addr %s463, 16
        %s465 = scalar_lea.vmem [#allocation3], %s464
        // Predicated region
        $region37: #{tpu_custom_call.1} parent=35 // pred_check
          %p466 = pneg %p129
        $region38: #{tpu_custom_call.1} parent=35 // pred_check_branch
          %468 = sbr.rel (%p466) target = $region40
        $region39: #{tpu_custom_call.1} parent=35 // pred_region
          %s469 = smul.u32 2, %s17
          %s470 = ssub.s32 3, %s469
          %p471 = scmp.lt.s32.totalorder %s470, 2
          %s472 = scalar_select %p471, %s470, 2
          %s473 = smul.u32 128, %s472
          %p474 = scmp.ne.s32.totalorder 0, %s473
          %s475 = smul.addr %s469, 8
          %s476 = scalar_lea.vmem %s4, %s475
          // Predicated region
          $region41: #{tpu_custom_call.1} parent=39 // pred_check
            %p477 = pneg %p474
          $region42: #{tpu_custom_call.1} parent=39 // pred_check_branch
            %479 = sbr.rel (%p477) target = $region44
          $region43: #{tpu_custom_call.1} parent=39 // pred_region
            // Predicated region
            $region45: #{tpu_custom_call.1} parent=43 // pred_check
              _
            $region46: #{tpu_custom_call.1} parent=43 // pred_check_branch
              %481 = sbr.rel (0) target = $region48
            $region47: #{tpu_custom_call.1} parent=43 // pred_region
              // Predicated region
              $region67: #{tpu_custom_call.1} parent=47 // pred_check
                _
              $region68: #{tpu_custom_call.1} parent=47 // pred_check_branch
                %532 = sbr.rel (0) target = $region70
              $region69: #{tpu_custom_call.1} parent=47 // pred_region
                %s533 = sshrl.u32 %s472, 1
                // While loop
                $region71: #{tpu_custom_call.1} parent=69 // loop_pre_header
                  _
                $region72: #{tpu_custom_call.1} parent=69 // loop_header
                  %s535 = sphi 0, %s537
                  %p536 = scmp.ge.s32.totalorder %s535, %s533
                  %s540 = sphi 0, %s549
                  %s541 = sphi %s461, %s552
                  %s542 = sphi %s476, %s553
                $region73: #{tpu_custom_call.1} parent=69 // loop_header_branch
                  %539 = sbr.rel (%p536) target = $region77
                $region74: #{tpu_custom_call.1} parent=69 // loop_body
                  %v543 = vld [vmem:[%s541] sm:$0xff]
                  %544 = vst [vmem:[%s542] sm:$0xff] %v543
                  %v545 = vld [vmem:[%s541 + $0x8] sm:$0xff]
                  %546 = vst [vmem:[%s542 + $0x8] sm:$0xff] %v545
                  %s547 = sadd.s32 1, %s540
                  %p548 = scmp.ge.s32.totalorder %s547, %s533
                  %s549 = scalar_select %p548, 0, %s547
                  %s550 = smul.u32 %s549, 16
                  %s551 = smul.u32 %s549, 16
                  %s552 = scalar_lea.vmem %s461, %s550 [#allocation2]
                  %s553 = scalar_lea.vmem %s476, %s551
                $region75: #{tpu_custom_call.1} parent=69 // loop_footer
                  %s537 = sadd.s32 %s535, 1
                $region76: #{tpu_custom_call.1} parent=69 // loop_footer_branch
                  %534 = sbr.rel target = $region72
                $region77: #{tpu_custom_call.1} parent=69 // loop_exit
                  _
                %s554 = sshrl.u32 %s472, 1
                %s555 = sand.u32 %s472, 1
                %s556 = smul.u32 %s554, 2
                %s557 = smul.u32 8, %s556
                %s558 = scalar_lea.vmem %s461, %s557 [#allocation2]
                %s559 = smul.u32 8, %s556
                %s560 = scalar_lea.vmem %s476, %s559
                // While loop
                $region78: #{tpu_custom_call.1} parent=69 // loop_pre_header
                  _
                $region79: #{tpu_custom_call.1} parent=69 // loop_header
                  %s562 = sphi 0, %s564
                  %p563 = scmp.ge.s32.totalorder %s562, %s555
                  %s567 = sphi 0, %s574
                  %s568 = sphi %s558, %s577
                  %s569 = sphi %s560, %s578
                $region80: #{tpu_custom_call.1} parent=69 // loop_header_branch
                  %566 = sbr.rel (%p563) target = $region84
                $region81: #{tpu_custom_call.1} parent=69 // loop_body
                  %v570 = vld [vmem:[%s568] sm:$0xff]
                  %571 = vst [vmem:[%s569] sm:$0xff] %v570
                  %s572 = sadd.s32 1, %s567
                  %p573 = scmp.ge.s32.totalorder %s572, %s555
                  %s574 = scalar_select %p573, 0, %s572
                  %s575 = smul.u32 %s574, 8
                  %s576 = smul.u32 %s574, 8
                  %s577 = scalar_lea.vmem %s558, %s575 [#allocation2]
                  %s578 = scalar_lea.vmem %s560, %s576
                $region82: #{tpu_custom_call.1} parent=69 // loop_footer
                  %s564 = sadd.s32 %s562, 1
                $region83: #{tpu_custom_call.1} parent=69 // loop_footer_branch
                  %561 = sbr.rel target = $region79
                $region84: #{tpu_custom_call.1} parent=69 // loop_exit
                  _
              $region70: #{tpu_custom_call.1} parent=47 // pred_fallthru
                _
              // Predicated region
              $region85: #{tpu_custom_call.1} parent=47 // pred_check
                _
              $region86: #{tpu_custom_call.1} parent=47 // pred_check_branch
                %580 = sbr.rel target = $region88
              $region87: #{tpu_custom_call.1} parent=47 // pred_region
                _
              $region88: #{tpu_custom_call.1} parent=47 // pred_fallthru
                _
            $region48: #{tpu_custom_call.1} parent=43 // pred_fallthru
              _
            // Predicated region
            $region49: #{tpu_custom_call.1} parent=43 // pred_check
              _
            $region50: #{tpu_custom_call.1} parent=43 // pred_check_branch
              %483 = sbr.rel target = $region52
            $region51: #{tpu_custom_call.1} parent=43 // pred_region
              %s485 = sshrl.u32 %s472, 1
              // While loop
              $region53: #{tpu_custom_call.1} parent=51 // loop_pre_header
                _
              $region54: #{tpu_custom_call.1} parent=51 // loop_header
                %s487 = sphi 0, %s489
                %p488 = scmp.ge.s32.totalorder %s487, %s485
                %s492 = sphi 0, %s501
                %s493 = sphi %s461, %s504
                %s494 = sphi %s476, %s505
              $region55: #{tpu_custom_call.1} parent=51 // loop_header_branch
                %491 = sbr.rel (%p488) target = $region59
              $region56: #{tpu_custom_call.1} parent=51 // loop_body
                %v495 = vld [vmem:[%s493] sm:$0xff]
                %496 = vst [vmem:[%s494] sm:$0xff] %v495
                %v497 = vld [vmem:[%s493 + $0x8] sm:$0xff]
                %498 = vst [vmem:[%s494 + $0x8] sm:$0xff] %v497
                %s499 = sadd.s32 1, %s492
                %p500 = scmp.ge.s32.totalorder %s499, %s485
                %s501 = scalar_select %p500, 0, %s499
                %s502 = smul.u32 %s501, 16
                %s503 = smul.u32 %s501, 16
                %s504 = scalar_lea.vmem %s461, %s502 [#allocation2]
                %s505 = scalar_lea.vmem %s476, %s503
              $region57: #{tpu_custom_call.1} parent=51 // loop_footer
                %s489 = sadd.s32 %s487, 1
              $region58: #{tpu_custom_call.1} parent=51 // loop_footer_branch
                %486 = sbr.rel target = $region54
              $region59: #{tpu_custom_call.1} parent=51 // loop_exit
                _
              %s506 = sshrl.u32 %s472, 1
              %s507 = sand.u32 %s472, 1
              %s508 = smul.u32 %s506, 2
              %s509 = smul.u32 8, %s508
              %s510 = scalar_lea.vmem %s461, %s509 [#allocation2]
              %s511 = smul.u32 8, %s508
              %s512 = scalar_lea.vmem %s476, %s511
              // While loop
              $region60: #{tpu_custom_call.1} parent=51 // loop_pre_header
                _
              $region61: #{tpu_custom_call.1} parent=51 // loop_header
                %s514 = sphi 0, %s516
                %p515 = scmp.ge.s32.totalorder %s514, %s507
                %s519 = sphi 0, %s526
                %s520 = sphi %s510, %s529
                %s521 = sphi %s512, %s530
              $region62: #{tpu_custom_call.1} parent=51 // loop_header_branch
                %518 = sbr.rel (%p515) target = $region66
              $region63: #{tpu_custom_call.1} parent=51 // loop_body
                %v522 = vld [vmem:[%s520] sm:$0xff]
                %523 = vst [vmem:[%s521] sm:$0xff] %v522
                %s524 = sadd.s32 1, %s519
                %p525 = scmp.ge.s32.totalorder %s524, %s507
                %s526 = scalar_select %p525, 0, %s524
                %s527 = smul.u32 %s526, 8
                %s528 = smul.u32 %s526, 8
                %s529 = scalar_lea.vmem %s510, %s527 [#allocation2]
                %s530 = scalar_lea.vmem %s512, %s528
              $region64: #{tpu_custom_call.1} parent=51 // loop_footer
                %s516 = sadd.s32 %s514, 1
              $region65: #{tpu_custom_call.1} parent=51 // loop_footer_branch
                %513 = sbr.rel target = $region61
              $region66: #{tpu_custom_call.1} parent=51 // loop_exit
                _
            $region52: #{tpu_custom_call.1} parent=43 // pred_fallthru
              _
          $region44: #{tpu_custom_call.1} parent=39 // pred_fallthru
            _
          %581 = vnop
        $region40: #{tpu_custom_call.1} parent=35 // pred_fallthru
          _
        // Predicated region
        $region89: #{tpu_custom_call.1} parent=35 // pred_check
          %p582 = pneg %p155
        $region90: #{tpu_custom_call.1} parent=35 // pred_check_branch
          %584 = sbr.rel (%p582) target = $region92
        $region91: #{tpu_custom_call.1} parent=35 // pred_region
          %s585 = smul.u32 2, %s17
          %s586 = ssub.s32 3, %s585
          %p587 = scmp.lt.s32.totalorder %s586, 2
          %s588 = scalar_select %p587, %s586, 2
          %s589 = smul.u32 128, %s588
          %p590 = scmp.ne.s32.totalorder 0, %s589
          %s591 = smul.addr %s585, 8
          %s592 = scalar_lea.vmem %s5, %s591
          // Predicated region
          $region93: #{tpu_custom_call.1} parent=91 // pred_check
            %p593 = pneg %p590
          $region94: #{tpu_custom_call.1} parent=91 // pred_check_branch
            %595 = sbr.rel (%p593) target = $region96
          $region95: #{tpu_custom_call.1} parent=91 // pred_region
            // Predicated region
            $region97: #{tpu_custom_call.1} parent=95 // pred_check
              _
            $region98: #{tpu_custom_call.1} parent=95 // pred_check_branch
              %597 = sbr.rel (0) target = $region100
            $region99: #{tpu_custom_call.1} parent=95 // pred_region
              // Predicated region
              $region119: #{tpu_custom_call.1} parent=99 // pred_check
                _
              $region120: #{tpu_custom_call.1} parent=99 // pred_check_branch
                %648 = sbr.rel (0) target = $region122
              $region121: #{tpu_custom_call.1} parent=99 // pred_region
                %s649 = sshrl.u32 %s588, 1
                // While loop
                $region123: #{tpu_custom_call.1} parent=121 // loop_pre_header
                  _
                $region124: #{tpu_custom_call.1} parent=121 // loop_header
                  %s651 = sphi 0, %s653
                  %p652 = scmp.ge.s32.totalorder %s651, %s649
                  %s656 = sphi 0, %s665
                  %s657 = sphi %s465, %s668
                  %s658 = sphi %s592, %s669
                $region125: #{tpu_custom_call.1} parent=121 // loop_header_branch
                  %655 = sbr.rel (%p652) target = $region129
                $region126: #{tpu_custom_call.1} parent=121 // loop_body
                  %v659 = vld [vmem:[%s657] sm:$0xff]
                  %660 = vst [vmem:[%s658] sm:$0xff] %v659
                  %v661 = vld [vmem:[%s657 + $0x8] sm:$0xff]
                  %662 = vst [vmem:[%s658 + $0x8] sm:$0xff] %v661
                  %s663 = sadd.s32 1, %s656
                  %p664 = scmp.ge.s32.totalorder %s663, %s649
                  %s665 = scalar_select %p664, 0, %s663
                  %s666 = smul.u32 %s665, 16
                  %s667 = smul.u32 %s665, 16
                  %s668 = scalar_lea.vmem %s465, %s666 [#allocation3]
                  %s669 = scalar_lea.vmem %s592, %s667
                $region127: #{tpu_custom_call.1} parent=121 // loop_footer
                  %s653 = sadd.s32 %s651, 1
                $region128: #{tpu_custom_call.1} parent=121 // loop_footer_branch
                  %650 = sbr.rel target = $region124
                $region129: #{tpu_custom_call.1} parent=121 // loop_exit
                  _
                %s670 = sshrl.u32 %s588, 1
                %s671 = sand.u32 %s588, 1
                %s672 = smul.u32 %s670, 2
                %s673 = smul.u32 8, %s672
                %s674 = scalar_lea.vmem %s465, %s673 [#allocation3]
                %s675 = smul.u32 8, %s672
                %s676 = scalar_lea.vmem %s592, %s675
                // While loop
                $region130: #{tpu_custom_call.1} parent=121 // loop_pre_header
                  _
                $region131: #{tpu_custom_call.1} parent=121 // loop_header
                  %s678 = sphi 0, %s680
                  %p679 = scmp.ge.s32.totalorder %s678, %s671
                  %s683 = sphi 0, %s690
                  %s684 = sphi %s674, %s693
                  %s685 = sphi %s676, %s694
                $region132: #{tpu_custom_call.1} parent=121 // loop_header_branch
                  %682 = sbr.rel (%p679) target = $region136
                $region133: #{tpu_custom_call.1} parent=121 // loop_body
                  %v686 = vld [vmem:[%s684] sm:$0xff]
                  %687 = vst [vmem:[%s685] sm:$0xff] %v686
                  %s688 = sadd.s32 1, %s683
                  %p689 = scmp.ge.s32.totalorder %s688, %s671
                  %s690 = scalar_select %p689, 0, %s688
                  %s691 = smul.u32 %s690, 8
                  %s692 = smul.u32 %s690, 8
                  %s693 = scalar_lea.vmem %s674, %s691 [#allocation3]
                  %s694 = scalar_lea.vmem %s676, %s692
                $region134: #{tpu_custom_call.1} parent=121 // loop_footer
                  %s680 = sadd.s32 %s678, 1
                $region135: #{tpu_custom_call.1} parent=121 // loop_footer_branch
                  %677 = sbr.rel target = $region131
                $region136: #{tpu_custom_call.1} parent=121 // loop_exit
                  _
              $region122: #{tpu_custom_call.1} parent=99 // pred_fallthru
                _
              // Predicated region
              $region137: #{tpu_custom_call.1} parent=99 // pred_check
                _
              $region138: #{tpu_custom_call.1} parent=99 // pred_check_branch
                %696 = sbr.rel target = $region140
              $region139: #{tpu_custom_call.1} parent=99 // pred_region
                _
              $region140: #{tpu_custom_call.1} parent=99 // pred_fallthru
                _
            $region100: #{tpu_custom_call.1} parent=95 // pred_fallthru
              _
            // Predicated region
            $region101: #{tpu_custom_call.1} parent=95 // pred_check
              _
            $region102: #{tpu_custom_call.1} parent=95 // pred_check_branch
              %599 = sbr.rel target = $region104
            $region103: #{tpu_custom_call.1} parent=95 // pred_region
              %s601 = sshrl.u32 %s588, 1
              // While loop
              $region105: #{tpu_custom_call.1} parent=103 // loop_pre_header
                _
              $region106: #{tpu_custom_call.1} parent=103 // loop_header
                %s603 = sphi 0, %s605
                %p604 = scmp.ge.s32.totalorder %s603, %s601
                %s608 = sphi 0, %s617
                %s609 = sphi %s465, %s620
                %s610 = sphi %s592, %s621
              $region107: #{tpu_custom_call.1} parent=103 // loop_header_branch
                %607 = sbr.rel (%p604) target = $region111
              $region108: #{tpu_custom_call.1} parent=103 // loop_body
                %v611 = vld [vmem:[%s609] sm:$0xff]
                %612 = vst [vmem:[%s610] sm:$0xff] %v611
                %v613 = vld [vmem:[%s609 + $0x8] sm:$0xff]
                %614 = vst [vmem:[%s610 + $0x8] sm:$0xff] %v613
                %s615 = sadd.s32 1, %s608
                %p616 = scmp.ge.s32.totalorder %s615, %s601
                %s617 = scalar_select %p616, 0, %s615
                %s618 = smul.u32 %s617, 16
                %s619 = smul.u32 %s617, 16
                %s620 = scalar_lea.vmem %s465, %s618 [#allocation3]
                %s621 = scalar_lea.vmem %s592, %s619
              $region109: #{tpu_custom_call.1} parent=103 // loop_footer
                %s605 = sadd.s32 %s603, 1
              $region110: #{tpu_custom_call.1} parent=103 // loop_footer_branch
                %602 = sbr.rel target = $region106
              $region111: #{tpu_custom_call.1} parent=103 // loop_exit
                _
              %s622 = sshrl.u32 %s588, 1
              %s623 = sand.u32 %s588, 1
              %s624 = smul.u32 %s622, 2
              %s625 = smul.u32 8, %s624
              %s626 = scalar_lea.vmem %s465, %s625 [#allocation3]
              %s627 = smul.u32 8, %s624
              %s628 = scalar_lea.vmem %s592, %s627
              // While loop
              $region112: #{tpu_custom_call.1} parent=103 // loop_pre_header
                _
              $region113: #{tpu_custom_call.1} parent=103 // loop_header
                %s630 = sphi 0, %s632
                %p631 = scmp.ge.s32.totalorder %s630, %s623
                %s635 = sphi 0, %s642
                %s636 = sphi %s626, %s645
                %s637 = sphi %s628, %s646
              $region114: #{tpu_custom_call.1} parent=103 // loop_header_branch
                %634 = sbr.rel (%p631) target = $region118
              $region115: #{tpu_custom_call.1} parent=103 // loop_body
                %v638 = vld [vmem:[%s636] sm:$0xff]
                %639 = vst [vmem:[%s637] sm:$0xff] %v638
                %s640 = sadd.s32 1, %s635
                %p641 = scmp.ge.s32.totalorder %s640, %s623
                %s642 = scalar_select %p641, 0, %s640
                %s643 = smul.u32 %s642, 8
                %s644 = smul.u32 %s642, 8
                %s645 = scalar_lea.vmem %s626, %s643 [#allocation3]
                %s646 = scalar_lea.vmem %s628, %s644
              $region116: #{tpu_custom_call.1} parent=103 // loop_footer
                %s632 = sadd.s32 %s630, 1
              $region117: #{tpu_custom_call.1} parent=103 // loop_footer_branch
                %629 = sbr.rel target = $region113
              $region118: #{tpu_custom_call.1} parent=103 // loop_exit
                _
            $region104: #{tpu_custom_call.1} parent=95 // pred_fallthru
              _
          $region96: #{tpu_custom_call.1} parent=91 // pred_fallthru
            _
          %697 = vnop
        $region92: #{tpu_custom_call.1} parent=35 // pred_fallthru
          _
      $region36: #{tpu_custom_call.1} parent=5 // pred_fallthru
        _
      %p698 = scmp.le.s32.totalorder 2, %s12
      // Predicated region
      $region141: #{tpu_custom_call.1} parent=5 // pred_check
        %p699 = pneg %p698
      $region142: #{tpu_custom_call.1} parent=5 // pred_check_branch
        %701 = sbr.rel (%p699) target = $region144
      $region143: #{tpu_custom_call.1} parent=5 // pred_region
        %s702 = ssub.s32 %s12, 2
        // Predicated region
        $region145: #{tpu_custom_call.1} parent=143 // pred_check
          %p703 = pneg %p135
        $region146: #{tpu_custom_call.1} parent=143 // pred_check_branch
          %705 = sbr.rel (%p703) target = $region148
        $region147: #{tpu_custom_call.1} parent=143 // pred_region
          %s706 = sand.u32 %s120, 1
          %s707 = sand.u32 %s120, 1
          %s708 = smul.addr %s707, 16
          %s709 = scalar_lea.vmem [#allocation2], %s708
        $region148: #{tpu_custom_call.1} parent=143 // pred_fallthru
          _
        // Predicated region
        $region149: #{tpu_custom_call.1} parent=143 // pred_check
          %p710 = pneg %p161
        $region150: #{tpu_custom_call.1} parent=143 // pred_check_branch
          %712 = sbr.rel (%p710) target = $region152
        $region151: #{tpu_custom_call.1} parent=143 // pred_region
          %s713 = sand.u32 %s146, 1
          %s714 = sand.u32 %s146, 1
          %s715 = smul.addr %s714, 16
          %s716 = scalar_lea.vmem [#allocation3], %s715
        $region152: #{tpu_custom_call.1} parent=143 // pred_fallthru
          _
      $region144: #{tpu_custom_call.1} parent=5 // pred_fallthru
        _
    $region6: #{tpu_custom_call.1} parent=1 // loop_footer
      %s16 = sadd.s32 1, %s12
    $region7: #{tpu_custom_call.1} parent=1 // loop_footer_branch
      %11 = sbr.rel target = $region3
    $region8: #{tpu_custom_call.1} parent=1 // loop_exit
      _

</llo_original>
